<compile_context>
chip_gen: v5e
topology: v5e:2x2
jax: 0.10.0
libtpu: 0.0.40
codegen_flags: <defaults>
</compile_context>

<pallas_src>
import jax
import jax.numpy as jnp
from jax import lax
from jax.experimental import pallas as pl
from jax.experimental.pallas import tpu as pltpu


def _cdiv(a, b):
    return -(-a // b)


def _round_up(a, b):
    return _cdiv(a, b) * b


def _vmem_capacity_bytes():
    """Physical VMEM of the attached TPU (fallback: 64 MiB, the v7x minimum)."""
    try:
        info = pltpu.get_tpu_info()
        for name in ("vmem_capacity_bytes", "vmem_bytes", "vmem_size_bytes"):
            v = getattr(info, name, None)
            if v:
                return int(v)
    except Exception:
        pass
    return 64 * 1024 * 1024


def _pick_tiling(Mtot, D, R):
    """Choose the M tile (tm), padded M and an explicit VMEM limit.

    Working set per grid step (everything double-buffered by BlockSpec):
      inputs  : 2 * D * tm * 2B   (bf16 x tile)
      outputs : 2 * R * tm * 4B   (f32 result tile)
      fixed   : 2 * R * D * 2B    (grid-invariant folded weights) + bias
    """
    phys = _vmem_capacity_bytes()
    tile_budget = phys // 2                       # leave half for compiler scratch etc.
    fixed = 2 * R * D * 2 + 2 * R * 4 + (64 << 10)
    per_m = 2 * D * 2 + 2 * R * 4
    tm_cap = (tile_budget - fixed) // per_m
    tm_cap = max(128, min(32768, tm_cap // 128 * 128))

    n_tiles = max(1, _cdiv(Mtot, tm_cap))
    if Mtot > 128:
        n_tiles = max(n_tiles, 2)                 # >=2 parallel steps -> v7x megacore
    tm = _round_up(_cdiv(Mtot, n_tiles), 128)     # balanced tiles, 128-lane aligned
    Mpad = _round_up(Mtot, tm)

    vmem_limit = phys * 5 // 8                    # ~40 MiB on v7x, ~80 MiB on v5e/v6e
    return tm, Mpad, vmem_limit


def _relu_convT_kernel(x_ref, w_ref, b_ref, o_ref):
    # x_ref: (D, tm)   bf16  shared input tile (one DMA per M-tile)
    # w_ref: (R, D)    bf16  phase-folded weights, grid-invariant (single DMA)
    # b_ref: (R, 1)    f32   per-(phase, channel) bias
    # o_ref: (R, tm)   f32   lane-dense output slab, R = S*S*Cp
    x = jnp.maximum(x_ref[...], 0.0).astype(x_ref.dtype)            # fused ReLU (once)
    y = jnp.dot(w_ref[...], x, preferred_element_type=jnp.float32)  # (R, tm) on MXU
    o_ref[...] = (y + b_ref[...]).astype(o_ref.dtype)


def relu_conv_transpose2d(x, w, b, *, stride, padding):
    """ReLU followed by ConvTranspose2d with PyTorch semantics.

    x: (N, Cin, H, W) float32 (NCHW, matching the PyTorch module)
    w: (Cin, Cout, K, K)  PyTorch ConvTranspose2d weight layout
    b: (Cout,)
    """
    N, Cin, H, W = x.shape
    _, Cout, K, _ = w.shape
    S, P = stride, padding
    Ho = (H - 1) * S - 2 * P + K
    Wo = (W - 1) * S - 2 * P + K

    # Sub-pixel decomposition: for output index oh, oh + P = g*S + rh, and only
    # taps kh = rh + S*m (m = 0..Kp-1) contribute, reading input row ih = g - m.
    Kp = -(-K // S)                        # ceil(K / S): surviving taps per phase/dim
    gmax_h = (Ho + P - 1) // S
    gmax_w = (Wo + P - 1) // S
    Gh, Gw = gmax_h + 1, gmax_w + 1        # phase-grid extent per dim
    pt = Kp - 1                            # top/left zero pad of the raw input
    pb_h = max(0, gmax_h - H + 1)          # bottom/right zero pad
    pb_w = max(0, gmax_w - W + 1)

    D = Kp * Kp * Cin                      # folded contraction depth
    Cp = _round_up(Cout, 8)                # sublane-pad channels only (f32 output)
    R = S * S * Cp                         # phase-folded MXU row dimension
    Mtot = N * Gh * Gw
    tm, Mpad, vmem_limit = _pick_tiling(Mtot, D, R)

    # --- glue: compact bf16 (D, M) input; Kp*Kp shifted windows of the *raw*
    #     input folded into the contraction (no zero-dilation anywhere) ---
    xc = jnp.transpose(x, (1, 0, 2, 3)).astype(jnp.bfloat16)   # (Cin, N, H, W)
    xc = jnp.pad(xc, ((0, 0), (0, 0), (pt, pb_h), (pt, pb_w)))
    wins = [xc[:, :, oh:oh + Gh, ow:ow + Gw]
            for oh in range(Kp) for ow in range(Kp)]           # (Cin, N, Gh, Gw) each
    xT = jnp.stack(wins, axis=0).reshape(D, Mtot)              # D index = o*Cin + ci
    xT = jnp.pad(xT, ((0, 0), (0, Mpad - Mtot)))

    # --- glue: phase-folded weights  WT[(rh*S+rw)*Cp + co, (oh*Kp+ow)*Cin + ci] ---
    phase_w = []
    for rh in range(S):
        for rw in range(S):
            taps = []
            for oh in range(Kp):
                for ow in range(Kp):
                    kh = rh + S * (Kp - 1 - oh)
                    kw = rw + S * (Kp - 1 - ow)
                    if kh < K and kw < K:
                        taps.append(w[:, :, kh, kw])           # (Cin, Cout)
                    else:
                        taps.append(jnp.zeros((Cin, Cout), w.dtype))
            wt = jnp.stack(taps, axis=0).reshape(D, Cout).T    # (Cout, D)
            phase_w.append(wt)
    WT = jnp.stack(phase_w, axis=0)                            # (S*S, Cout, D)
    WT = jnp.pad(WT, ((0, 0), (0, Cp - Cout), (0, 0)))
    WT = WT.reshape(R, D).astype(jnp.bfloat16)
    b2 = jnp.tile(jnp.pad(b, (0, Cp - Cout)), S * S).reshape(R, 1).astype(jnp.float32)

    out = pl.pallas_call(
        _relu_convT_kernel,
        out_shape=jax.ShapeDtypeStruct((R, Mpad), jnp.float32),
        grid_spec=pltpu.PrefetchScalarGridSpec(
            num_scalar_prefetch=0,
            grid=(Mpad // tm,),
            in_specs=[
                pl.BlockSpec((D, tm), lambda m: (0, m)),
                pl.BlockSpec((R, D), lambda m: (0, 0)),   # grid-invariant weights
                pl.BlockSpec((R, 1), lambda m: (0, 0)),   # grid-invariant bias
            ],
            out_specs=pl.BlockSpec((R, tm), lambda m: (0, m)),
        ),
        compiler_params=pltpu.CompilerParams(
            dimension_semantics=("parallel",),
            vmem_limit_bytes=vmem_limit),
    )(xT, WT, b2)

    # --- glue: pixel-shuffle the S*S phases back together, crop, already NCHW ---
    y = out.reshape(S * S, Cp, Mpad)[:, :Cout, :Mtot]
    y = y.reshape(S, S, Cout, N, Gh, Gw)
    y = jnp.transpose(y, (3, 2, 4, 0, 5, 1))                   # (N, Cout, Gh, S, Gw, S)
    y = y.reshape(N, Cout, Gh * S, Gw * S)                     # index = oh + P
    return y[:, :, P:P + Ho, P:P + Wo]


def relu_conv_transpose2d_ref(x, w, b, *, stride, padding,
                              compute_dtype=jnp.float32):
    """Pure-JAX reference (ReLU + ConvTranspose2d), operands cast to compute_dtype."""
    K = w.shape[2]
    xr = jnp.maximum(x, 0.0).astype(compute_dtype)
    w_conv = jnp.transpose(w, (1, 0, 2, 3))[:, :, ::-1, ::-1].astype(compute_dtype)
    pad = K - 1 - padding
    y = lax.conv_general_dilated(
        xr, w_conv, window_strides=(1, 1),
        padding=[(pad, pad), (pad, pad)],
        lhs_dilation=(stride, stride),
        dimension_numbers=("NCHW", "OIHW", "NCHW"),
        preferred_element_type=jnp.float32)
    return y.astype(jnp.float32) + b[None, :, None, None]


def init_up_params(key, scale, input_feature, output_feature):
    """Deterministic parameters matching Up.__init__ layer shapes."""
    def conv_params(k, cin, cout, ksize):
        k1, k2 = jax.random.split(k)
        bound = 1.0 / float(cout * ksize * ksize) ** 0.5
        w = jax.random.uniform(k1, (cin, cout, ksize, ksize), jnp.float32, -bound, bound)
        b = jax.random.uniform(k2, (cout,), jnp.float32, -bound, bound)
        return w, b

    if scale == 2:
        return [(conv_params(key, input_feature, output_feature, 4), 2, 1)]
    if scale == 3:
        return [(conv_params(key, input_feature, output_feature, 5), 3, 1)]
    if scale == 4:
        k1, k2 = jax.random.split(key)
        return [(conv_params(k1, input_feature, input_feature, 4), 2, 1),
                (conv_params(k2, input_feature, output_feature, 4), 2, 1)]
    raise ValueError("scale must be 2, 3 or 4")


def up_forward(x, params, *, use_ref=False, ref_dtype=jnp.float32):
    out = x
    for (w, b), stride, padding in params:
        if use_ref:
            out = relu_conv_transpose2d_ref(out, w, b, stride=stride,
                                            padding=padding,
                                            compute_dtype=ref_dtype)
        else:
            out = relu_conv_transpose2d(out, w, b, stride=stride, padding=padding)
    return out


if __name__ == "__main__":
    key = jax.random.PRNGKey(0)
    kx, kp2, kp3, kp4 = jax.random.split(key, 4)

    N, C_in, C_out, H, W = 2, 4, 4, 16, 16
    x = jax.random.normal(kx, (N, C_in, H, W), jnp.float32)

    ok = True
    for scale, kp in ((2, kp2), (3, kp3), (4, kp4)):
        params = init_up_params(kp, scale, C_in, C_out)
        y = jax.block_until_ready(up_forward(x, params))
        # Reference uses the same bf16 operand quantization as the kernel's MXU
        # inputs (f32 accumulation), so the parity check stays tight.
        y_ref = jax.block_until_ready(
            up_forward(x, params, use_ref=True, ref_dtype=jnp.bfloat16))
        assert y.shape == (N, C_out, H * scale, W * scale), (scale, y.shape)
        ok &= bool(jnp.allclose(y, y_ref, rtol=1e-2, atol=1e-2))

    if ok:
        print("KERNEL_OK")
</pallas_src>

<mosaic_0001>
module attributes {stable_mosaic.version = 11 : i64} {
  func.func @_relu_convT_kernel(%arg0: i32, %arg1: memref<16x384xbf16, #tpu.memory_space<vmem>>, %arg2: memref<32x16xbf16, #tpu.memory_space<vmem>>, %arg3: memref<32x1xf32, #tpu.memory_space<vmem>>, %arg4: memref<32x384xf32, #tpu.memory_space<vmem>>) attributes {dimension_semantics = [#tpu.dimension_semantics<parallel>], iteration_bounds = array<i64: 2>, scalar_prefetch = 0 : i64, scratch_operands = 0 : i64, tpu.core_type = #tpu.core_type<tc>, window_params = [{transform_indices = @transform_0, window_bounds = array<i64: 16, 384>}, {pipeline_mode = #tpu.pipeline_mode<synchronous>, transform_indices = @transform_1, window_bounds = array<i64: 32, 16>}, {pipeline_mode = #tpu.pipeline_mode<synchronous>, transform_indices = @transform_2, window_bounds = array<i64: 32, 1>}, {transform_indices = @transform_3, window_bounds = array<i64: 32, 384>}]} {
    %c0 = arith.constant 0 : index
    %c0_0 = arith.constant 0 : index
    %0 = vector.load %arg1[%c0, %c0_0] : memref<16x384xbf16, #tpu.memory_space<vmem>>, vector<16x384xbf16>
    %cst = arith.constant 0.000000e+00 : bf16
    %1 = vector.broadcast %cst : bf16 to vector<16x384xbf16>
    %2 = arith.maximumf %0, %1 : vector<16x384xbf16>
    %c0_1 = arith.constant 0 : index
    %c0_2 = arith.constant 0 : index
    %3 = vector.load %arg2[%c0_1, %c0_2] : memref<32x16xbf16, #tpu.memory_space<vmem>>, vector<32x16xbf16>
    %cst_3 = arith.constant dense<0.000000e+00> : vector<32x384xf32>
    %4 = tpu.matmul %3, %2, %cst_3 {dimension_numbers = #tpu.dot_dimension_numbers<[1], [0], [0], [1], [0, 0, 1, 1], [], []>} : vector<32x16xbf16>, vector<16x384xbf16>, vector<32x384xf32> -> vector<32x384xf32>
    %c0_4 = arith.constant 0 : index
    %c0_5 = arith.constant 0 : index
    %5 = vector.load %arg3[%c0_4, %c0_5] : memref<32x1xf32, #tpu.memory_space<vmem>>, vector<32x1xf32>
    %6 = vector.broadcast %5 : vector<32x1xf32> to vector<32x384xf32>
    %7 = arith.addf %4, %6 : vector<32x384xf32>
    %c0_6 = arith.constant 0 : index
    %c0_7 = arith.constant 0 : index
    %8 = vector.load %arg4[%c0_6, %c0_7] : memref<32x384xf32, #tpu.memory_space<vmem>>, vector<32x384xf32>
    tpu.vector_store %arg4[%c0_6, %c0_7], %7 {strides = array<i32>} : memref<32x384xf32, #tpu.memory_space<vmem>>, vector<32x384xf32>,
    return
  }
  func.func @transform_0(%arg0: i32) -> (i32, i32) {
    %c0_i32 = arith.constant 0 : i32
    %c0_i32_0 = arith.constant 0 : i32
    return %c0_i32, %arg0 : i32, i32
  }
  func.func @transform_1(%arg0: i32) -> (i32, i32) {
    %c0_i32 = arith.constant 0 : i32
    %c0_i32_0 = arith.constant 0 : i32
    %c0_i32_1 = arith.constant 0 : i32
    return %c0_i32, %c0_i32_0 : i32, i32
  }
  func.func @transform_2(%arg0: i32) -> (i32, i32) {
    %c0_i32 = arith.constant 0 : i32
    %c0_i32_0 = arith.constant 0 : i32
    %c0_i32_1 = arith.constant 0 : i32
    return %c0_i32, %c0_i32_0 : i32, i32
  }
  func.func @transform_3(%arg0: i32) -> (i32, i32) {
    %c0_i32 = arith.constant 0 : i32
    %c0_i32_0 = arith.constant 0 : i32
    return %c0_i32, %arg0 : i32, i32
  }
}

</mosaic_0001>

<llo_original>
// kernel: tpu_custom_call.1
$region0: #{tpu_custom_call.1}
  #allocation0 [shape = 'u32[]', space=smem, size = 0x4, offset = 0x4, fixed_abs, tag = 'smem constant byte address 0x4 - core index']
  #allocation1 [shape = 'u32[72,128]{1,0:T(1,128)}', space=vmem, size = 0x9000, scoped, tag = 'internal scratch']
  %s0 = inlined_call_operand.vmem [shape: bf16[16,768], index: 0, kind: input, shape index: {}]
  %s1 = inlined_call_operand.vmem [shape: bf16[32,16], index: 1, kind: input, shape index: {}]
  %s2 = inlined_call_operand.vmem [shape: f32[32,1], index: 2, kind: input, shape index: {}]
  %s3 = inlined_call_operand.hbm [shape: f32[32,768], index: 3, kind: output, shape index: {}]
  %s4 = sld [smem:[#allocation0]]
  $region71: #{tpu_custom_call.1} parent=0
    _
  %s6 = ssub.s32 1, %s4
  %s7 = scalar_select 0, %s6, %s4
  $region1: #{tpu_custom_call.1} parent=0
    #allocation2 [shape = 'u8[24576]{0}', space=vmem, size = 0x6000, scoped, tag = 'input window, operand 0']
    #allocation3 [shape = 'u8[98304]{0}', space=vmem, size = 0x18000, scoped, tag = 'output window, operand 0']
    #allocation4 [shape = 's32[2]{0}', space=sflag, size = 0x8, scoped, tag = 'scoped memory for tpu_custom_call.1']
    %8 = vsyncpa [#allocation4], 0
    %s9 = scalar_lea.sflag [#allocation4], 1
    %10 = vsyncpa %s9, 0
    loop: start=0, step=1, limit=4
    $region2: #{tpu_custom_call.1} parent=1 // loop_pre_header
      _
    $region3: #{tpu_custom_call.1} parent=1 // loop_header
      %s12 = sphi 0, %s16
      %p13 = scmp.ge.s32.totalorder %s12, 4
      %s22 = sphi 0, %s24
      %s25 = sphi 0, %s22
      %s26 = sphi 0, %s25
      %s42 = sphi 0, %s26
      %s46 = sphi 0, %s46
      %s48 = sphi 0, %s46
      %s49 = sphi 0, %s48
      %s63 = sphi 0, %s49
      %s67 = sphi 0, %s67
      %s69 = sphi 0, %s67
      %s70 = sphi 0, %s69
      %s84 = sphi 0, %s70
      %s90 = sphi 0, %s92
      %s93 = sphi 0, %s90
      %s94 = sphi 0, %s93
      %s110 = sphi 0, %s94
    $region4: #{tpu_custom_call.1} parent=1 // loop_header_branch
      %15 = sbr.rel (%p13) target = $region8
    $region5: #{tpu_custom_call.1} parent=1 // loop_body
      %s17 = ssub.s32 %s12, 1
      %s18 = ssub.s32 %s12, 2
      %s19 = sadd.s32 %s12, 1
      %s20 = ssub.s32 %s12, %s19
      %p21 = scmp.eq.s32.totalorder %s20, 0
      %s23 = sadd.s32 %s22, 1
      %s24 = scalar_select %p21, %s22, %s23
      %p27 = pneg %p21
      %p28 = scmp.eq.s32.totalorder %s12, 1
      %p29 = por %p27, %p28
      %p30 = scmp.ne.s32.totalorder %s22, %s25
      %p31 = scmp.eq.s32.totalorder %s12, 0
      %p32 = por %p30, %p31
      %p33 = scmp.ne.s32.totalorder %s22, %s25
      %p34 = scmp.eq.s32.totalorder %s17, 1
      %p35 = por %p33, %p34
      %p36 = scmp.ne.s32.totalorder %s25, %s26
      %p37 = scmp.eq.s32.totalorder %s17, 0
      %p38 = por %p36, %p37
      %p39 = scmp.ne.s32.totalorder %s25, %s26
      %p40 = scmp.eq.s32.totalorder %s18, 1
      %p41 = por %p39, %p40
      %p43 = scmp.ne.s32.totalorder %s26, %s42
      %p44 = scmp.eq.s32.totalorder %s18, 0
      %p45 = por %p43, %p44
      %s47 = sadd.s32 %s46, 1
      %p50 = scmp.eq.s32.totalorder %s12, 1
      %p51 = scmp.ne.s32.totalorder %s46, %s48
      %p52 = scmp.eq.s32.totalorder %s12, 0
      %p53 = por %p51, %p52
      %p54 = scmp.ne.s32.totalorder %s46, %s48
      %p55 = scmp.eq.s32.totalorder %s17, 1
      %p56 = por %p54, %p55
      %p57 = scmp.ne.s32.totalorder %s48, %s49
      %p58 = scmp.eq.s32.totalorder %s17, 0
      %p59 = por %p57, %p58
      %p60 = scmp.ne.s32.totalorder %s48, %s49
      %p61 = scmp.eq.s32.totalorder %s18, 1
      %p62 = por %p60, %p61
      %p64 = scmp.ne.s32.totalorder %s49, %s63
      %p65 = scmp.eq.s32.totalorder %s18, 0
      %p66 = por %p64, %p65
      %s68 = sadd.s32 %s67, 1
      %p71 = scmp.eq.s32.totalorder %s12, 1
      %p72 = scmp.ne.s32.totalorder %s67, %s69
      %p73 = scmp.eq.s32.totalorder %s12, 0
      %p74 = por %p72, %p73
      %p75 = scmp.ne.s32.totalorder %s67, %s69
      %p76 = scmp.eq.s32.totalorder %s17, 1
      %p77 = por %p75, %p76
      %p78 = scmp.ne.s32.totalorder %s69, %s70
      %p79 = scmp.eq.s32.totalorder %s17, 0
      %p80 = por %p78, %p79
      %p81 = scmp.ne.s32.totalorder %s69, %s70
      %p82 = scmp.eq.s32.totalorder %s18, 1
      %p83 = por %p81, %p82
      %p85 = scmp.ne.s32.totalorder %s70, %s84
      %p86 = scmp.eq.s32.totalorder %s18, 0
      %p87 = por %p85, %p86
      %s88 = ssub.s32 %s12, %s19
      %p89 = scmp.eq.s32.totalorder %s88, 0
      %s91 = sadd.s32 %s90, 1
      %s92 = scalar_select %p89, %s90, %s91
      %p95 = pneg %p89
      %p96 = scmp.eq.s32.totalorder %s12, 1
      %p97 = por %p95, %p96
      %p98 = scmp.ne.s32.totalorder %s90, %s93
      %p99 = scmp.eq.s32.totalorder %s12, 0
      %p100 = por %p98, %p99
      %p101 = scmp.ne.s32.totalorder %s90, %s93
      %p102 = scmp.eq.s32.totalorder %s17, 1
      %p103 = por %p101, %p102
      %p104 = scmp.ne.s32.totalorder %s93, %s94
      %p105 = scmp.eq.s32.totalorder %s17, 0
      %p106 = por %p104, %p105
      %p107 = scmp.ne.s32.totalorder %s93, %s94
      %p108 = scmp.eq.s32.totalorder %s18, 1
      %p109 = por %p107, %p108
      %p111 = scmp.ne.s32.totalorder %s94, %s110
      %p112 = scmp.eq.s32.totalorder %s18, 0
      %p113 = por %p111, %p112
      %p114 = scmp.le.s32.totalorder 1, %s12
      %p115 = scmp.lt.s32.totalorder %s12, 3
      %p116 = pnand %p114, %p115
      %p117 = pneg %p116
      // Predicated region
      $region9: #{tpu_custom_call.1} parent=5 // pred_check
        _
      $region10: #{tpu_custom_call.1} parent=5 // pred_check_branch
        %119 = sbr.rel (%p116) target = $region12
      $region11: #{tpu_custom_call.1} parent=5 // pred_region
        %s120 = ssub.s32 %s12, 1
        // Predicated region
        $region13: #{tpu_custom_call.1} parent=11 // pred_check
          %p121 = pneg %p59
        $region14: #{tpu_custom_call.1} parent=11 // pred_check_branch
          %123 = sbr.rel (%p121) target = $region16
        $region15: #{tpu_custom_call.1} parent=11 // pred_region
          _
        $region16: #{tpu_custom_call.1} parent=11 // pred_fallthru
          _
        // Predicated region
        $region17: #{tpu_custom_call.1} parent=11 // pred_check
          %p124 = pneg %p80
        $region18: #{tpu_custom_call.1} parent=11 // pred_check_branch
          %126 = sbr.rel (%p124) target = $region20
        $region19: #{tpu_custom_call.1} parent=11 // pred_region
          _
        $region20: #{tpu_custom_call.1} parent=11 // pred_fallthru
          _
      $region12: #{tpu_custom_call.1} parent=5 // pred_fallthru
        _
      %p127 = scmp.lt.s32.totalorder %s12, 2
      // Predicated region
      $region21: #{tpu_custom_call.1} parent=5 // pred_check
        %p128 = pneg %p127
      $region22: #{tpu_custom_call.1} parent=5 // pred_check_branch
        %130 = sbr.rel (%p128) target = $region24
      $region23: #{tpu_custom_call.1} parent=5 // pred_region
        // Predicated region
        $region25: #{tpu_custom_call.1} parent=23 // pred_check
          %p131 = pneg %p32
        $region26: #{tpu_custom_call.1} parent=23 // pred_check_branch
          %133 = sbr.rel (%p131) target = $region28
        $region27: #{tpu_custom_call.1} parent=23 // pred_region
          %s134 = sand.u32 %s22, 1
          %s135 = sand.u32 %s22, 1
          %s136 = smul.addr %s135, 24
          %s137 = scalar_lea.vmem [#allocation2], %s136
          %s138 = smul.u32 3, %s12
          %s139 = smul.addr %s138, 4
          %s140 = scalar_lea.vmem %s0, %s139
          // Predicated region
          $region29: #{tpu_custom_call.1} parent=27 // pred_check
            _
          $region30: #{tpu_custom_call.1} parent=27 // pred_check_branch
            %142 = sbr.rel (0) target = $region32
          $region31: #{tpu_custom_call.1} parent=27 // pred_region
            // Predicated region
            $region33: #{tpu_custom_call.1} parent=31 // pred_check
              _
            $region34: #{tpu_custom_call.1} parent=31 // pred_check_branch
              %144 = sbr.rel (0) target = $region36
            $region35: #{tpu_custom_call.1} parent=31 // pred_region
              %s145 = scalar_lea.vmem %s140, 8
              %s146 = scalar_lea.vmem %s137, 8 [#allocation2]
              loop: start=0, step=1, limit=1
              $region37: #{tpu_custom_call.1} parent=35 // loop_pre_header
                _
              $region38: #{tpu_custom_call.1} parent=35 // loop_header
                %s148 = sphi 0, %s152
                %p149 = scmp.ge.s32.totalorder %s148, 1
                %s153 = sphi %s140, %s140
                %s154 = sphi %s137, %s137
              $region39: #{tpu_custom_call.1} parent=35 // loop_header_branch
                %151 = sbr.rel (%p149) target = $region43
              $region40: #{tpu_custom_call.1} parent=35 // loop_body
                %v155 = vld [vmem:[%s153] sm:$0xff]
                %156 = vst [vmem:[%s154] sm:$0xff] %v155
                %v157 = vld [vmem:[%s153 + $0x18] sm:$0xff]
                %158 = vst [vmem:[%s154 + $0xc] sm:$0xff] %v157
              $region41: #{tpu_custom_call.1} parent=35 // loop_footer
                %s152 = sadd.s32 1, %s148
              $region42: #{tpu_custom_call.1} parent=35 // loop_footer_branch
                %147 = sbr.rel target = $region38
              $region43: #{tpu_custom_call.1} parent=35 // loop_exit
                _
              %s160 = ssub.s32 16, 1
              loop: start=0, step=1, limit=1
              $region44: #{tpu_custom_call.1} parent=35 // loop_pre_header
                _
              $region45: #{tpu_custom_call.1} parent=35 // loop_header
                %s162 = sphi 0, %s166
                %p163 = scmp.ge.s32.totalorder %s162, 1
                %s167 = sphi %s145, %s145
                %s168 = sphi %s146, %s146
              $region46: #{tpu_custom_call.1} parent=35 // loop_header_branch
                %165 = sbr.rel (%p163) target = $region50
              $region47: #{tpu_custom_call.1} parent=35 // loop_body
                %v169 = vld [vmem:[%s167] sm:%s160]
                %170 = vst [vmem:[%s168] sm:%s160] %v169
                %v171 = vld [vmem:[%s167 + $0x18] sm:%s160]
                %172 = vst [vmem:[%s168 + $0xc] sm:%s160] %v171
              $region48: #{tpu_custom_call.1} parent=35 // loop_footer
                %s166 = sadd.s32 1, %s162
              $region49: #{tpu_custom_call.1} parent=35 // loop_footer_branch
                %161 = sbr.rel target = $region45
              $region50: #{tpu_custom_call.1} parent=35 // loop_exit
                _
            $region36: #{tpu_custom_call.1} parent=31 // pred_fallthru
              _
          $region32: #{tpu_custom_call.1} parent=27 // pred_fallthru
            _
          %173 = vnop
        $region28: #{tpu_custom_call.1} parent=23 // pred_fallthru
          _
      $region24: #{tpu_custom_call.1} parent=5 // pred_fallthru
        _
      %p174 = scmp.le.s32.totalorder 1, %s12
      %p175 = scmp.lt.s32.totalorder %s12, 3
      %p176 = pnand %p174, %p175
      %p177 = pneg %p176
      // Predicated region
      $region51: #{tpu_custom_call.1} parent=5 // pred_check
        _
      $region52: #{tpu_custom_call.1} parent=5 // pred_check_branch
        %179 = sbr.rel (%p176) target = $region54
      $region53: #{tpu_custom_call.1} parent=5 // pred_region
        %s180 = ssub.s32 %s12, 1
        %s181 = sand.u32 %s25, 1
        %s182 = sand.u32 %s25, 1
        %s183 = smul.addr %s182, 24
        %s184 = scalar_lea.vmem [#allocation2], %s183
        // Predicated region
        $region55: #{tpu_custom_call.1} parent=53 // pred_check
          %p185 = pneg %p38
        $region56: #{tpu_custom_call.1} parent=53 // pred_check_branch
          %187 = sbr.rel (%p185) target = $region58
        $region57: #{tpu_custom_call.1} parent=53 // pred_region
          _
        $region58: #{tpu_custom_call.1} parent=53 // pred_fallthru
          _
        %s188 = sand.u32 %s25, 1
        %s189 = sand.u32 %s25, 1
        %s190 = smul.addr %s189, 24
        %s191 = scalar_lea.vmem [#allocation2], %s190
        %p192 = pneg %p38
        %p193 = pneg %p35
        %p194 = pneg %p59
        %p195 = pneg %p56
        %p196 = pneg %p80
        %p197 = pneg %p77
        %p198 = pneg %p106
        %p199 = pneg %p103
        %s200 = sand.u32 %s93, 1
        %s201 = scalar_lea.sflag [#allocation4], %s200
        %s202 = sand.u32 %s93, 1
        %s203 = smul.addr %s202, 96
        %s204 = scalar_lea.vmem [#allocation3], %s203
        %s205 = smul.u32 3, %s17
        %s206 = smul.u32 3, %s17
        %v208 = vld [vmem:[%s184] sm:$0xff]
        %v209 = vld [vmem:[%s184 + $0x8] sm:$0xf]
        %v210 = vld [vmem:[%s184 + $0xc] sm:$0xff]
        %v211 = vld [vmem:[%s184 + $0x14] sm:$0xf]
        %v212 = vunpack.c.l.bf16 %v208
        %v213 = vunpack.c.h.bf16 %v208
        %v214 = vunpack.c.l.bf16 %v209
        %v215 = vunpack.c.l.bf16 %v210
        %v216 = vunpack.c.h.bf16 %v210
        %v217 = vunpack.c.l.bf16 %v211
        %v218 = vmax.f32 %v212, 0.0
        %v219 = vmax.f32 %v213, 0.0
        %v220 = vmax.f32 %v214, 0.0
        %v221 = vmax.f32 %v215, 0.0
        %v222 = vmax.f32 %v216, 0.0
        %v223 = vmax.f32 %v217, 0.0
        %v224 = vpack.c.bf16 %v221, %v218
        %v225 = vpack.c.bf16 %v222, %v219
        %v226 = vpack.c.bf16 %v223, %v220
        %v227 = vld [vmem:[%s1] sm:$0xf]
        %v228 = vld [vmem:[%s1 + $0x4] sm:$0xf]
        %v229 = vld [vmem:[%s1 + $0x8] sm:$0xf]
        %v230 = vld [vmem:[%s1 + $0xc] sm:$0xf]
        %v231 = vld [vmem:[%s2] sm:$0xff]
        %v232 = vld [vmem:[%s2 + $0x8] sm:$0xff]
        %v233 = vld [vmem:[%s2 + $0x10] sm:$0xff]
        %v234 = vld [vmem:[%s2 + $0x18] sm:$0xff]
        %236 = vset.pattern.permute.xlu0 0
        %237 = vperm.xlu0 %236, %v231
        %v238 = vpop.permute.xlu0 %237
        %241 = vset.pattern.permute.xlu0 0
        %242 = vperm.xlu0 %241, %v232
        %v243 = vpop.permute.xlu0 %242
        %246 = vset.pattern.permute.xlu0 0
        %247 = vperm.xlu0 %246, %v233
        %v248 = vpop.permute.xlu0 %247
        %251 = vset.pattern.permute.xlu0 0
        %252 = vperm.xlu0 %251, %v234
        %v253 = vpop.permute.xlu0 %252
        %v259 = vunpack.c.l.b16 %v227
        %v260 = vunpack.c.l.b16 %v228
        %v261 = vunpack.c.l.b16 %v229
        %v262 = vunpack.c.l.b16 %v230
        %v263 = vpack.c.b16 %v260, %v259
        %v264 = vpack.c.b16 %v262, %v261
        %vm265 = vcmask 130048
        %v267 = vsel %vm265, %v263, 0
        %v270 = vsel %vm265, %v264, 0
        %272 = vmatpush.bf16.msra.mxu0 0
        %273 = vmatpush.bf16.msra.mxu0 0
        %274 = vmatpush.bf16.msra.mxu0 0
        %275 = vmatpush.bf16.msra.mxu0 0
        %276 = vmatpush.bf16.msra.mxu0 0
        %277 = vmatpush.bf16.msra.mxu0 0
        %278 = vmatpush.bf16.msra.mxu0 0
        %279 = vmatpush.bf16.msra.mxu0 %v224
        %280 = vmatmul.bf16.gmra.mxu0 %v267
        %v281 = vpop.f32.mrf.mxu0
        %v282 = vadd.f32 %v238, %v281
        %v283 = vpop.f32.mrf.mxu0
        %v284 = vadd.f32 %v243, %v283
        %285 = vmatmul.bf16.gmra.mxu0 %v270
        %v286 = vpop.f32.mrf.mxu0
        %v287 = vadd.f32 %v248, %v286
        %v288 = vpop.f32.mrf.mxu0
        %v289 = vadd.f32 %v253, %v288
        %290 = vdwg.mxu0
        %291 = vmatpush.bf16.msra.mxu0 0
        %292 = vmatpush.bf16.msra.mxu0 0
        %293 = vmatpush.bf16.msra.mxu0 0
        %294 = vmatpush.bf16.msra.mxu0 0
        %295 = vmatpush.bf16.msra.mxu0 0
        %296 = vmatpush.bf16.msra.mxu0 0
        %297 = vmatpush.bf16.msra.mxu0 0
        %298 = vmatpush.bf16.msra.mxu0 %v225
        %299 = vmatmul.bf16.gmra.mxu0 %v267
        %v300 = vpop.f32.mrf.mxu0
        %v301 = vadd.f32 %v238, %v300
        %v302 = vpop.f32.mrf.mxu0
        %v303 = vadd.f32 %v243, %v302
        %304 = vmatmul.bf16.gmra.mxu0 %v270
        %v305 = vpop.f32.mrf.mxu0
        %v306 = vadd.f32 %v248, %v305
        %v307 = vpop.f32.mrf.mxu0
        %v308 = vadd.f32 %v253, %v307
        %309 = vdwg.mxu0
        %310 = vmatpush.bf16.msra.mxu0 0
        %311 = vmatpush.bf16.msra.mxu0 0
        %312 = vmatpush.bf16.msra.mxu0 0
        %313 = vmatpush.bf16.msra.mxu0 0
        %314 = vmatpush.bf16.msra.mxu0 0
        %315 = vmatpush.bf16.msra.mxu0 0
        %316 = vmatpush.bf16.msra.mxu0 0
        %317 = vmatpush.bf16.msra.mxu0 %v226
        %318 = vmatmul.bf16.gmra.mxu0 %v267
        %v319 = vpop.f32.mrf.mxu0
        %v320 = vadd.f32 %v238, %v319
        %v321 = vpop.f32.mrf.mxu0
        %v322 = vadd.f32 %v243, %v321
        %323 = vmatmul.bf16.gmra.mxu0 %v270
        %v324 = vpop.f32.mrf.mxu0
        %v325 = vadd.f32 %v248, %v324
        %v326 = vpop.f32.mrf.mxu0
        %v327 = vadd.f32 %v253, %v326
        %328 = vdwg.mxu0
        %329 = vst [vmem:[%s204] sm:$0xff] %v282
        %330 = vst [vmem:[%s204 + $0x8] sm:$0xff] %v301
        %331 = vst [vmem:[%s204 + $0x10] sm:$0xff] %v320
        %332 = vst [vmem:[%s204 + $0x18] sm:$0xff] %v284
        %333 = vst [vmem:[%s204 + $0x20] sm:$0xff] %v303
        %334 = vst [vmem:[%s204 + $0x28] sm:$0xff] %v322
        %335 = vst [vmem:[%s204 + $0x30] sm:$0xff] %v287
        %336 = vst [vmem:[%s204 + $0x38] sm:$0xff] %v306
        %337 = vst [vmem:[%s204 + $0x40] sm:$0xff] %v325
        %338 = vst [vmem:[%s204 + $0x48] sm:$0xff] %v289
        %339 = vst [vmem:[%s204 + $0x50] sm:$0xff] %v308
        %340 = vst [vmem:[%s204 + $0x58] sm:$0xff] %v327
        %s341 = sand.u32 %s93, 1
        %s342 = scalar_lea.sflag [#allocation4], %s341
        %s343 = sand.u32 %s93, 1
        %s344 = smul.addr %s343, 96
        %s345 = scalar_lea.vmem [#allocation3], %s344
        // Predicated region
        $region59: #{tpu_custom_call.1} parent=53 // pred_check
          %p346 = pneg %p103
        $region60: #{tpu_custom_call.1} parent=53 // pred_check_branch
          %348 = sbr.rel (%p346) target = $region62
        $region61: #{tpu_custom_call.1} parent=53 // pred_region
          %s349 = smul.u32 3, %s17
          %351 = vsyncadd %s342, 0
          %s352 = smul.addr %s349, 8
          %s353 = scalar_lea.hbm %s3, %s352
          %s354 = sshll.u32 %s345, 4
          %s355 = int_to_ptr.vmem [resolvable:$true] %s354
          %s356 = sshll.u32 %s353, 4
          %s357 = int_to_ptr.hbm [resolvable:$true] %s356
          %362 = dma.vmem_to_hbm [thread:$0]  %s355, 1536, %s357, %s342, 384, 768, 24
        $region62: #{tpu_custom_call.1} parent=53 // pred_fallthru
          _
      $region54: #{tpu_custom_call.1} parent=5 // pred_fallthru
        _
      %p363 = scmp.le.s32.totalorder 2, %s12
      // Predicated region
      $region63: #{tpu_custom_call.1} parent=5 // pred_check
        %p364 = pneg %p363
      $region64: #{tpu_custom_call.1} parent=5 // pred_check_branch
        %366 = sbr.rel (%p364) target = $region66
      $region65: #{tpu_custom_call.1} parent=5 // pred_region
        %s367 = ssub.s32 %s12, 2
        // Predicated region
        $region67: #{tpu_custom_call.1} parent=65 // pred_check
          %p368 = pneg %p109
        $region68: #{tpu_custom_call.1} parent=65 // pred_check_branch
          %370 = sbr.rel (%p368) target = $region70
        $region69: #{tpu_custom_call.1} parent=65 // pred_region
          %s371 = sand.u32 %s94, 1
          %s372 = scalar_lea.sflag [#allocation4], %s371
          %s373 = sand.u32 %s94, 1
          %s374 = smul.addr %s373, 96
          %s375 = scalar_lea.vmem [#allocation3], %s374
          %377 = dma.done %s372, 1536
        $region70: #{tpu_custom_call.1} parent=65 // pred_fallthru
          _
      $region66: #{tpu_custom_call.1} parent=5 // pred_fallthru
        _
    $region6: #{tpu_custom_call.1} parent=1 // loop_footer
      %s16 = sadd.s32 1, %s12
    $region7: #{tpu_custom_call.1} parent=1 // loop_footer_branch
      %11 = sbr.rel target = $region3
    $region8: #{tpu_custom_call.1} parent=1 // loop_exit
      _
    %378 = vsyncpa [#allocation4], 1
    %s379 = scalar_lea.sflag [#allocation4], 1
    %380 = vsyncpa %s379, 1

</llo_original>
